<compile_context>
chip_gen: v5e
topology: v5e:2x2
jax: 0.10.0
libtpu: 0.0.40
codegen_flags: <defaults>
</compile_context>

<pallas_src>
import jax
import jax.numpy as jnp
from jax.experimental import pallas as pl
from jax.experimental.pallas import tpu as pltpu


def _round_up(x, m):
    return ((x + m - 1) // m) * m


def _sublane_multiple(dtype):
    # Min sublane tile by element size: f32 -> 8, bf16 -> 16, int8/fp8 -> 32.
    return {4: 8, 2: 16, 1: 32}[jnp.dtype(dtype).itemsize]


def _symdecoder_kernel(x_ref, w1_ref, b1_ref, wh_ref, bh_ref, sg_ref, sp_ref):
    # Hidden projection + tanh (f32 accumulation on the MXU, f32 bias).
    x = x_ref[...]
    h = jnp.tanh(
        jnp.dot(x, w1_ref[...], preferred_element_type=jnp.float32) + b1_ref[...]
    )
    # Fused heads: one matmul -> [tb, F+S], one tanh stream.
    h = h.astype(wh_ref.dtype)
    out = jnp.tanh(
        jnp.dot(h, wh_ref[...], preferred_element_type=jnp.float32) + bh_ref[...]
    )
    # Slice the fused tile in-kernel and store the two real outputs directly
    # (no wrapper-side slicing pass, no padded-lane write inflation).
    F = sg_ref.shape[-1]
    S = sp_ref.shape[-1]
    sg_ref[...] = out[:, :F].astype(sg_ref.dtype)
    sp_ref[...] = out[:, F:F + S].astype(sp_ref.dtype)


def prepare_params(w1, b1, wsg, bsg, wsp, bsp, *, compute_dtype=jnp.bfloat16):
    """One-time parameter prep (run OUTSIDE the hot forward loop).

    w1: [F, H]; b1: [1, H]; wsg: [H, F]; bsg: [1, F]; wsp: [H, S]; bsp: [1, S]
    (weights stored [in, out], i.e. transposed vs. PyTorch).
    """
    F = wsg.shape[1]
    S = wsp.shape[1]
    wh = jnp.concatenate([wsg, wsp], axis=1)                  # [H, F+S] fused heads
    bh = jnp.concatenate([bsg, bsp], axis=1).astype(jnp.float32)
    b1f = b1.astype(jnp.float32)
    if compute_dtype is not None:
        w1 = w1.astype(compute_dtype)
        wh = wh.astype(compute_dtype)
    return dict(w1=w1, b1=b1f, wh=wh, bh=bh, F=F, S=S,
                compute_dtype=compute_dtype)


def sym_decoder_pallas(x, params, *, block_b=1024, out_dtype=None):
    """x: [B, F]; params: output of prepare_params().  Returns (sg [B,F], sp [B,S])."""
    B, Fin = x.shape
    w1, b1, wh, bh = params["w1"], params["b1"], params["wh"], params["bh"]
    F, S = params["F"], params["S"]
    cdt = params["compute_dtype"]
    H = w1.shape[1]
    N = F + S
    out_dtype = out_dtype if out_dtype is not None else x.dtype

    x_c = x.astype(cdt) if cdt is not None else x
    sub = _sublane_multiple(x_c.dtype)

    # ---- Batch tiling: large tiles (amortize ~0.35us/step), >=2 steps when
    # possible so the "parallel" axis can shard across v7x's two TensorCores.
    if B % sub == 0:
        tb = min(_round_up(block_b, sub), max(_round_up(B // 2, sub), sub))
    elif B <= block_b:
        tb = B  # full-batch block: always a legal tiling, no host-side pad of x
    else:
        tb = _round_up(block_b, sub)  # ragged tail handled by Pallas partial blocks
    grid = (pl.cdiv(B, tb),)

    # Weights/biases: same block index every step -> stay resident in VMEM.
    resident = lambda shape: pl.BlockSpec(shape, lambda i: (0, 0))

    sg, sp = pl.pallas_call(
        _symdecoder_kernel,
        out_shape=(jax.ShapeDtypeStruct((B, F), out_dtype),
                   jax.ShapeDtypeStruct((B, S), out_dtype)),
        grid=grid,
        in_specs=[
            pl.BlockSpec((tb, Fin), lambda i: (i, 0)),   # activation stream (pipelined)
            resident((Fin, H)),                          # w1
            resident((1, H)),                            # b1 (f32)
            resident((H, N)),                            # fused head weight
            resident((1, N)),                            # fused head bias (f32)
        ],
        out_specs=(pl.BlockSpec((tb, F), lambda i: (i, 0)),
                   pl.BlockSpec((tb, S), lambda i: (i, 0))),
        compiler_params=pltpu.CompilerParams(
            dimension_semantics=("parallel",)),          # megacore sharding on v7x
    )(x_c, w1, b1, wh, bh)
    return sg, sp


def init_params(key, feature_size, symmetry_size, hidden_size, dtype=jnp.float32):
    """Deterministic synthetic init (mimics nn.Linear uniform fan-in init).
    Weights stored as [in, out] (transposed vs. PyTorch's [out, in])."""
    ks = jax.random.split(key, 6)

    def lin(kw, kb, fan_in, fan_out):
        bound = 1.0 / (fan_in ** 0.5)
        w = jax.random.uniform(kw, (fan_in, fan_out), dtype, -bound, bound)
        b = jax.random.uniform(kb, (1, fan_out), dtype, -bound, bound)
        return w, b

    w1, b1 = lin(ks[0], ks[1], feature_size, hidden_size)
    wsg, bsg = lin(ks[2], ks[3], hidden_size, feature_size)
    wsp, bsp = lin(ks[4], ks[5], hidden_size, symmetry_size)
    return w1, b1, wsg, bsg, wsp, bsp


def sym_decoder_ref(x, w1, b1, wsg, bsg, wsp, bsp):
    h = jnp.tanh(x @ w1 + b1)
    return jnp.tanh(h @ wsg + bsg), jnp.tanh(h @ wsp + bsp)


if __name__ == "__main__":
    feature_size = 32
    symmetry_size = 8
    hidden_size = 32
    batch = 256          # many tree-node invocations stacked into one call

    key = jax.random.PRNGKey(0)
    kx, kp = jax.random.split(key)
    x = jax.random.normal(kx, (batch, feature_size), jnp.float32)
    raw = init_params(kp, feature_size, symmetry_size, hidden_size)
    sg_ref, sp_ref = sym_decoder_ref(x, *raw)

    # Default bf16-MXU path (f32 accumulation): params prepped once, outside jit'd forward.
    params_bf16 = prepare_params(*raw, compute_dtype=jnp.bfloat16)
    fwd = jax.jit(lambda xx: sym_decoder_pallas(xx, params_bf16))
    sg, sp = fwd(x)
    jax.block_until_ready((sg, sp))
    assert sg.shape == (batch, feature_size) and sp.shape == (batch, symmetry_size)
    assert jnp.allclose(sg, sg_ref, atol=5e-2, rtol=5e-2)
    assert jnp.allclose(sp, sp_ref, atol=5e-2, rtol=5e-2)

    # f32 path at a ragged batch size (exercises the full-batch-block fallback),
    # tight correctness check vs. reference.
    x_ragged = jax.random.normal(kx, (100, feature_size), jnp.float32)
    params_f32 = prepare_params(*raw, compute_dtype=None)
    fwd_f32 = jax.jit(lambda xx: sym_decoder_pallas(xx, params_f32))
    sg2, sp2 = fwd_f32(x_ragged)
    jax.block_until_ready((sg2, sp2))
    sg2_ref, sp2_ref = sym_decoder_ref(x_ragged, *raw)
    assert jnp.allclose(sg2, sg2_ref, atol=1e-5, rtol=1e-5)
    assert jnp.allclose(sp2, sp2_ref, atol=1e-5, rtol=1e-5)

    print("KERNEL_OK")
</pallas_src>

<mosaic_0001>
module attributes {stable_mosaic.version = 11 : i64} {
  func.func @_symdecoder_kernel(%arg0: i32, %arg1: memref<128x32xbf16, #tpu.memory_space<vmem>>, %arg2: memref<32x32xbf16, #tpu.memory_space<vmem>>, %arg3: memref<1x32xf32, #tpu.memory_space<vmem>>, %arg4: memref<32x40xbf16, #tpu.memory_space<vmem>>, %arg5: memref<1x40xf32, #tpu.memory_space<vmem>>, %arg6: memref<128x32xf32, #tpu.memory_space<vmem>>, %arg7: memref<128x8xf32, #tpu.memory_space<vmem>>) attributes {dimension_semantics = [#tpu.dimension_semantics<parallel>], iteration_bounds = array<i64: 2>, scalar_prefetch = 0 : i64, scratch_operands = 0 : i64, tpu.core_type = #tpu.core_type<tc>, window_params = [{transform_indices = @transform_0, window_bounds = array<i64: 128, 32>}, {pipeline_mode = #tpu.pipeline_mode<synchronous>, transform_indices = @transform_1, window_bounds = array<i64: 32, 32>}, {pipeline_mode = #tpu.pipeline_mode<synchronous>, transform_indices = @transform_2, window_bounds = array<i64: 1, 32>}, {pipeline_mode = #tpu.pipeline_mode<synchronous>, transform_indices = @transform_3, window_bounds = array<i64: 32, 40>}, {pipeline_mode = #tpu.pipeline_mode<synchronous>, transform_indices = @transform_4, window_bounds = array<i64: 1, 40>}, {transform_indices = @transform_5, window_bounds = array<i64: 128, 32>}, {transform_indices = @transform_6, window_bounds = array<i64: 128, 8>}]} {
    %c0 = arith.constant 0 : index
    %c0_0 = arith.constant 0 : index
    %0 = vector.load %arg1[%c0, %c0_0] : memref<128x32xbf16, #tpu.memory_space<vmem>>, vector<128x32xbf16>
    %c0_1 = arith.constant 0 : index
    %c0_2 = arith.constant 0 : index
    %1 = vector.load %arg2[%c0_1, %c0_2] : memref<32x32xbf16, #tpu.memory_space<vmem>>, vector<32x32xbf16>
    %cst = arith.constant dense<0.000000e+00> : vector<128x32xf32>
    %2 = tpu.matmul %0, %1, %cst {dimension_numbers = #tpu.dot_dimension_numbers<[1], [0], [0], [1], [0, 0, 1, 1], [], []>} : vector<128x32xbf16>, vector<32x32xbf16>, vector<128x32xf32> -> vector<128x32xf32>
    %c0_3 = arith.constant 0 : index
    %c0_4 = arith.constant 0 : index
    %3 = vector.load %arg3[%c0_3, %c0_4] : memref<1x32xf32, #tpu.memory_space<vmem>>, vector<1x32xf32>
    %4 = vector.broadcast %3 : vector<1x32xf32> to vector<128x32xf32>
    %5 = arith.addf %2, %4 : vector<128x32xf32>
    %6 = math.tanh %5 : vector<128x32xf32>
    %7 = arith.truncf %6 : vector<128x32xf32> to vector<128x32xbf16>
    %c0_5 = arith.constant 0 : index
    %c0_6 = arith.constant 0 : index
    %8 = vector.load %arg4[%c0_5, %c0_6] : memref<32x40xbf16, #tpu.memory_space<vmem>>, vector<32x40xbf16>
    %cst_7 = arith.constant dense<0.000000e+00> : vector<128x40xf32>
    %9 = tpu.matmul %7, %8, %cst_7 {dimension_numbers = #tpu.dot_dimension_numbers<[1], [0], [0], [1], [0, 0, 1, 1], [], []>} : vector<128x32xbf16>, vector<32x40xbf16>, vector<128x40xf32> -> vector<128x40xf32>
    %c0_8 = arith.constant 0 : index
    %c0_9 = arith.constant 0 : index
    %10 = vector.load %arg5[%c0_8, %c0_9] : memref<1x40xf32, #tpu.memory_space<vmem>>, vector<1x40xf32>
    %11 = vector.broadcast %10 : vector<1x40xf32> to vector<128x40xf32>
    %12 = arith.addf %9, %11 : vector<128x40xf32>
    %13 = math.tanh %12 : vector<128x40xf32>
    %14 = vector.extract_strided_slice %13 {offsets = [0, 0], sizes = [128, 32], strides = [1, 1]} : vector<128x40xf32> to vector<128x32xf32>
    %c0_10 = arith.constant 0 : index
    %c0_11 = arith.constant 0 : index
    %15 = vector.load %arg6[%c0_10, %c0_11] : memref<128x32xf32, #tpu.memory_space<vmem>>, vector<128x32xf32>
    tpu.vector_store %arg6[%c0_10, %c0_11], %14 {strides = array<i32>} : memref<128x32xf32, #tpu.memory_space<vmem>>, vector<128x32xf32>,
    %16 = vector.extract_strided_slice %13 {offsets = [0, 32], sizes = [128, 8], strides = [1, 1]} : vector<128x40xf32> to vector<128x8xf32>
    %c0_12 = arith.constant 0 : index
    %c0_13 = arith.constant 0 : index
    %17 = vector.load %arg7[%c0_12, %c0_13] : memref<128x8xf32, #tpu.memory_space<vmem>>, vector<128x8xf32>
    tpu.vector_store %arg7[%c0_12, %c0_13], %16 {strides = array<i32>} : memref<128x8xf32, #tpu.memory_space<vmem>>, vector<128x8xf32>,
    return
  }
  func.func @transform_0(%arg0: i32) -> (i32, i32) {
    %c0_i32 = arith.constant 0 : i32
    %c0_i32_0 = arith.constant 0 : i32
    return %arg0, %c0_i32 : i32, i32
  }
  func.func @transform_1(%arg0: i32) -> (i32, i32) {
    %c0_i32 = arith.constant 0 : i32
    %c0_i32_0 = arith.constant 0 : i32
    %c0_i32_1 = arith.constant 0 : i32
    return %c0_i32, %c0_i32_0 : i32, i32
  }
  func.func @transform_2(%arg0: i32) -> (i32, i32) {
    %c0_i32 = arith.constant 0 : i32
    %c0_i32_0 = arith.constant 0 : i32
    %c0_i32_1 = arith.constant 0 : i32
    return %c0_i32, %c0_i32_0 : i32, i32
  }
  func.func @transform_3(%arg0: i32) -> (i32, i32) {
    %c0_i32 = arith.constant 0 : i32
    %c0_i32_0 = arith.constant 0 : i32
    %c0_i32_1 = arith.constant 0 : i32
    return %c0_i32, %c0_i32_0 : i32, i32
  }
  func.func @transform_4(%arg0: i32) -> (i32, i32) {
    %c0_i32 = arith.constant 0 : i32
    %c0_i32_0 = arith.constant 0 : i32
    %c0_i32_1 = arith.constant 0 : i32
    return %c0_i32, %c0_i32_0 : i32, i32
  }
  func.func @transform_5(%arg0: i32) -> (i32, i32) {
    %c0_i32 = arith.constant 0 : i32
    %c0_i32_0 = arith.constant 0 : i32
    return %arg0, %c0_i32 : i32, i32
  }
  func.func @transform_6(%arg0: i32) -> (i32, i32) {
    %c0_i32 = arith.constant 0 : i32
    %c0_i32_0 = arith.constant 0 : i32
    return %arg0, %c0_i32 : i32, i32
  }
}

</mosaic_0001>

<llo_original>
// kernel: _lambda_.1
$region0: #{_lambda_.1}
  #allocation0 [shape = 'u32[]', space=smem, size = 0x4, offset = 0x4, fixed_abs, tag = 'smem constant byte address 0x4 - core index']
  #allocation1 [shape = 'u32[72,128]{1,0:T(1,128)}', space=vmem, size = 0x9000, scoped, tag = 'internal scratch']
  %s0 = inlined_call_operand.vmem [shape: bf16[256,32], index: 0, kind: input, shape index: {}]
  %s1 = inlined_call_operand.vmem [shape: bf16[32,32], index: 1, kind: input, shape index: {}]
  %s2 = inlined_call_operand.vmem [shape: f32[1,32], index: 2, kind: input, shape index: {}]
  %s3 = inlined_call_operand.vmem [shape: bf16[32,40], index: 3, kind: input, shape index: {}]
  %s4 = inlined_call_operand.vmem [shape: f32[1,40], index: 4, kind: input, shape index: {}]
  %s5 = inlined_call_operand.vmem [shape: f32[256,32], index: 5, kind: output, shape index: {0}]
  %s6 = inlined_call_operand.vmem [shape: f32[256,8], index: 6, kind: output, shape index: {1}]
  %7 = xla_tuple %s5, %s6
  %s8 = sld [smem:[#allocation0]]
  $region61: #{_lambda_.1} parent=0
    _
  %s10 = ssub.s32 1, %s8
  %s11 = scalar_select 0, %s10, %s8
  loop: start=0, step=1, limit=4
  $region2: #{_lambda_.1} parent=0 // loop_pre_header
    _
  $region3: #{_lambda_.1} parent=0 // loop_header
    %s13 = sphi 0, %s17
    %p14 = scmp.ge.s32.totalorder %s13, 4
    %s23 = sphi 0, %s25
    %s26 = sphi 0, %s23
    %s27 = sphi 0, %s26
    %s43 = sphi 0, %s27
    %s47 = sphi 0, %s47
    %s49 = sphi 0, %s47
    %s50 = sphi 0, %s49
    %s64 = sphi 0, %s50
    %s68 = sphi 0, %s68
    %s70 = sphi 0, %s68
    %s71 = sphi 0, %s70
    %s85 = sphi 0, %s71
    %s89 = sphi 0, %s89
    %s91 = sphi 0, %s89
    %s92 = sphi 0, %s91
    %s106 = sphi 0, %s92
    %s110 = sphi 0, %s110
    %s112 = sphi 0, %s110
    %s113 = sphi 0, %s112
    %s127 = sphi 0, %s113
    %s133 = sphi 0, %s135
    %s136 = sphi 0, %s133
    %s137 = sphi 0, %s136
    %s153 = sphi 0, %s137
    %s159 = sphi 0, %s161
    %s162 = sphi 0, %s159
    %s163 = sphi 0, %s162
    %s179 = sphi 0, %s163
  $region4: #{_lambda_.1} parent=0 // loop_header_branch
    %16 = sbr.rel (%p14) target = $region8
  $region5: #{_lambda_.1} parent=0 // loop_body
    %s18 = ssub.s32 %s13, 1
    %s19 = ssub.s32 %s13, 2
    %s20 = sadd.s32 %s13, 1
    %s21 = ssub.s32 %s13, %s20
    %p22 = scmp.eq.s32.totalorder %s21, 0
    %s24 = sadd.s32 %s23, 1
    %s25 = scalar_select %p22, %s23, %s24
    %p28 = pneg %p22
    %p29 = scmp.eq.s32.totalorder %s13, 1
    %p30 = por %p28, %p29
    %p31 = scmp.ne.s32.totalorder %s23, %s26
    %p32 = scmp.eq.s32.totalorder %s13, 0
    %p33 = por %p31, %p32
    %p34 = scmp.ne.s32.totalorder %s23, %s26
    %p35 = scmp.eq.s32.totalorder %s18, 1
    %p36 = por %p34, %p35
    %p37 = scmp.ne.s32.totalorder %s26, %s27
    %p38 = scmp.eq.s32.totalorder %s18, 0
    %p39 = por %p37, %p38
    %p40 = scmp.ne.s32.totalorder %s26, %s27
    %p41 = scmp.eq.s32.totalorder %s19, 1
    %p42 = por %p40, %p41
    %p44 = scmp.ne.s32.totalorder %s27, %s43
    %p45 = scmp.eq.s32.totalorder %s19, 0
    %p46 = por %p44, %p45
    %s48 = sadd.s32 %s47, 1
    %p51 = scmp.eq.s32.totalorder %s13, 1
    %p52 = scmp.ne.s32.totalorder %s47, %s49
    %p53 = scmp.eq.s32.totalorder %s13, 0
    %p54 = por %p52, %p53
    %p55 = scmp.ne.s32.totalorder %s47, %s49
    %p56 = scmp.eq.s32.totalorder %s18, 1
    %p57 = por %p55, %p56
    %p58 = scmp.ne.s32.totalorder %s49, %s50
    %p59 = scmp.eq.s32.totalorder %s18, 0
    %p60 = por %p58, %p59
    %p61 = scmp.ne.s32.totalorder %s49, %s50
    %p62 = scmp.eq.s32.totalorder %s19, 1
    %p63 = por %p61, %p62
    %p65 = scmp.ne.s32.totalorder %s50, %s64
    %p66 = scmp.eq.s32.totalorder %s19, 0
    %p67 = por %p65, %p66
    %s69 = sadd.s32 %s68, 1
    %p72 = scmp.eq.s32.totalorder %s13, 1
    %p73 = scmp.ne.s32.totalorder %s68, %s70
    %p74 = scmp.eq.s32.totalorder %s13, 0
    %p75 = por %p73, %p74
    %p76 = scmp.ne.s32.totalorder %s68, %s70
    %p77 = scmp.eq.s32.totalorder %s18, 1
    %p78 = por %p76, %p77
    %p79 = scmp.ne.s32.totalorder %s70, %s71
    %p80 = scmp.eq.s32.totalorder %s18, 0
    %p81 = por %p79, %p80
    %p82 = scmp.ne.s32.totalorder %s70, %s71
    %p83 = scmp.eq.s32.totalorder %s19, 1
    %p84 = por %p82, %p83
    %p86 = scmp.ne.s32.totalorder %s71, %s85
    %p87 = scmp.eq.s32.totalorder %s19, 0
    %p88 = por %p86, %p87
    %s90 = sadd.s32 %s89, 1
    %p93 = scmp.eq.s32.totalorder %s13, 1
    %p94 = scmp.ne.s32.totalorder %s89, %s91
    %p95 = scmp.eq.s32.totalorder %s13, 0
    %p96 = por %p94, %p95
    %p97 = scmp.ne.s32.totalorder %s89, %s91
    %p98 = scmp.eq.s32.totalorder %s18, 1
    %p99 = por %p97, %p98
    %p100 = scmp.ne.s32.totalorder %s91, %s92
    %p101 = scmp.eq.s32.totalorder %s18, 0
    %p102 = por %p100, %p101
    %p103 = scmp.ne.s32.totalorder %s91, %s92
    %p104 = scmp.eq.s32.totalorder %s19, 1
    %p105 = por %p103, %p104
    %p107 = scmp.ne.s32.totalorder %s92, %s106
    %p108 = scmp.eq.s32.totalorder %s19, 0
    %p109 = por %p107, %p108
    %s111 = sadd.s32 %s110, 1
    %p114 = scmp.eq.s32.totalorder %s13, 1
    %p115 = scmp.ne.s32.totalorder %s110, %s112
    %p116 = scmp.eq.s32.totalorder %s13, 0
    %p117 = por %p115, %p116
    %p118 = scmp.ne.s32.totalorder %s110, %s112
    %p119 = scmp.eq.s32.totalorder %s18, 1
    %p120 = por %p118, %p119
    %p121 = scmp.ne.s32.totalorder %s112, %s113
    %p122 = scmp.eq.s32.totalorder %s18, 0
    %p123 = por %p121, %p122
    %p124 = scmp.ne.s32.totalorder %s112, %s113
    %p125 = scmp.eq.s32.totalorder %s19, 1
    %p126 = por %p124, %p125
    %p128 = scmp.ne.s32.totalorder %s113, %s127
    %p129 = scmp.eq.s32.totalorder %s19, 0
    %p130 = por %p128, %p129
    %s131 = ssub.s32 %s13, %s20
    %p132 = scmp.eq.s32.totalorder %s131, 0
    %s134 = sadd.s32 %s133, 1
    %s135 = scalar_select %p132, %s133, %s134
    %p138 = pneg %p132
    %p139 = scmp.eq.s32.totalorder %s13, 1
    %p140 = por %p138, %p139
    %p141 = scmp.ne.s32.totalorder %s133, %s136
    %p142 = scmp.eq.s32.totalorder %s13, 0
    %p143 = por %p141, %p142
    %p144 = scmp.ne.s32.totalorder %s133, %s136
    %p145 = scmp.eq.s32.totalorder %s18, 1
    %p146 = por %p144, %p145
    %p147 = scmp.ne.s32.totalorder %s136, %s137
    %p148 = scmp.eq.s32.totalorder %s18, 0
    %p149 = por %p147, %p148
    %p150 = scmp.ne.s32.totalorder %s136, %s137
    %p151 = scmp.eq.s32.totalorder %s19, 1
    %p152 = por %p150, %p151
    %p154 = scmp.ne.s32.totalorder %s137, %s153
    %p155 = scmp.eq.s32.totalorder %s19, 0
    %p156 = por %p154, %p155
    %s157 = ssub.s32 %s13, %s20
    %p158 = scmp.eq.s32.totalorder %s157, 0
    %s160 = sadd.s32 %s159, 1
    %s161 = scalar_select %p158, %s159, %s160
    %p164 = pneg %p158
    %p165 = scmp.eq.s32.totalorder %s13, 1
    %p166 = por %p164, %p165
    %p167 = scmp.ne.s32.totalorder %s159, %s162
    %p168 = scmp.eq.s32.totalorder %s13, 0
    %p169 = por %p167, %p168
    %p170 = scmp.ne.s32.totalorder %s159, %s162
    %p171 = scmp.eq.s32.totalorder %s18, 1
    %p172 = por %p170, %p171
    %p173 = scmp.ne.s32.totalorder %s162, %s163
    %p174 = scmp.eq.s32.totalorder %s18, 0
    %p175 = por %p173, %p174
    %p176 = scmp.ne.s32.totalorder %s162, %s163
    %p177 = scmp.eq.s32.totalorder %s19, 1
    %p178 = por %p176, %p177
    %p180 = scmp.ne.s32.totalorder %s163, %s179
    %p181 = scmp.eq.s32.totalorder %s19, 0
    %p182 = por %p180, %p181
    %p183 = scmp.le.s32.totalorder 1, %s13
    %p184 = scmp.lt.s32.totalorder %s13, 3
    %p185 = pnand %p183, %p184
    %p186 = pneg %p185
    // Predicated region
    $region9: #{_lambda_.1} parent=5 // pred_check
      _
    $region10: #{_lambda_.1} parent=5 // pred_check_branch
      %188 = sbr.rel (%p185) target = $region12
    $region11: #{_lambda_.1} parent=5 // pred_region
      %s189 = ssub.s32 %s13, 1
      // Predicated region
      $region13: #{_lambda_.1} parent=11 // pred_check
        %p190 = pneg %p60
      $region14: #{_lambda_.1} parent=11 // pred_check_branch
        %192 = sbr.rel (%p190) target = $region16
      $region15: #{_lambda_.1} parent=11 // pred_region
        _
      $region16: #{_lambda_.1} parent=11 // pred_fallthru
        _
      // Predicated region
      $region17: #{_lambda_.1} parent=11 // pred_check
        %p193 = pneg %p81
      $region18: #{_lambda_.1} parent=11 // pred_check_branch
        %195 = sbr.rel (%p193) target = $region20
      $region19: #{_lambda_.1} parent=11 // pred_region
        _
      $region20: #{_lambda_.1} parent=11 // pred_fallthru
        _
      // Predicated region
      $region21: #{_lambda_.1} parent=11 // pred_check
        %p196 = pneg %p102
      $region22: #{_lambda_.1} parent=11 // pred_check_branch
        %198 = sbr.rel (%p196) target = $region24
      $region23: #{_lambda_.1} parent=11 // pred_region
        _
      $region24: #{_lambda_.1} parent=11 // pred_fallthru
        _
      // Predicated region
      $region25: #{_lambda_.1} parent=11 // pred_check
        %p199 = pneg %p123
      $region26: #{_lambda_.1} parent=11 // pred_check_branch
        %201 = sbr.rel (%p199) target = $region28
      $region27: #{_lambda_.1} parent=11 // pred_region
        _
      $region28: #{_lambda_.1} parent=11 // pred_fallthru
        _
    $region12: #{_lambda_.1} parent=5 // pred_fallthru
      _
    %p202 = scmp.lt.s32.totalorder %s13, 2
    // Predicated region
    $region29: #{_lambda_.1} parent=5 // pred_check
      %p203 = pneg %p202
    $region30: #{_lambda_.1} parent=5 // pred_check_branch
      %205 = sbr.rel (%p203) target = $region32
    $region31: #{_lambda_.1} parent=5 // pred_region
      // Predicated region
      $region33: #{_lambda_.1} parent=31 // pred_check
        %p206 = pneg %p33
      $region34: #{_lambda_.1} parent=31 // pred_check_branch
        %208 = sbr.rel (%p206) target = $region36
      $region35: #{_lambda_.1} parent=31 // pred_region
        %s209 = smul.u32 16, %s13
        %p210 = scmp.lt.s32.totalorder %s209, 31
        %s211 = scalar_select %p210, %s209, 31
        %s212 = smul.addr %s211, 4
        %s213 = scalar_lea.vmem %s0, %s212
        %s214 = smul.u32 16, %s13
      $region36: #{_lambda_.1} parent=31 // pred_fallthru
        _
    $region32: #{_lambda_.1} parent=5 // pred_fallthru
      _
    %p215 = scmp.le.s32.totalorder 1, %s13
    %p216 = scmp.lt.s32.totalorder %s13, 3
    %p217 = pnand %p215, %p216
    %p218 = pneg %p217
    // Predicated region
    $region37: #{_lambda_.1} parent=5 // pred_check
      _
    $region38: #{_lambda_.1} parent=5 // pred_check_branch
      %220 = sbr.rel (%p217) target = $region40
    $region39: #{_lambda_.1} parent=5 // pred_region
      %s221 = ssub.s32 %s13, 1
      %s222 = smul.u32 16, %s18
      %p223 = scmp.lt.s32.totalorder %s222, 31
      %s224 = scalar_select %p223, %s222, 31
      %s225 = smul.addr %s224, 4
      %s226 = scalar_lea.vmem %s0, %s225
      %p227 = pneg %p39
      %p228 = pneg %p36
      %p229 = pneg %p60
      %p230 = pneg %p57
      %p231 = pneg %p81
      %p232 = pneg %p78
      %p233 = pneg %p102
      %p234 = pneg %p99
      %p235 = pneg %p123
      %p236 = pneg %p120
      %p237 = pneg %p149
      %p238 = pneg %p146
      %s239 = smul.u32 16, %s18
      %p240 = scmp.lt.s32.totalorder %s239, 31
      %s241 = scalar_select %p240, %s239, 31
      %s242 = smul.addr %s241, 8
      %s243 = scalar_lea.vmem %s5, %s242
      %p244 = pneg %p175
      %p245 = pneg %p172
      %s246 = smul.u32 16, %s18
      %p247 = scmp.lt.s32.totalorder %s246, 31
      %s248 = scalar_select %p247, %s246, 31
      %s249 = smul.addr %s248, 8
      %s250 = scalar_lea.vmem %s6, %s249
      %s251 = smul.u32 16, %s18
      %p252 = scmp.lt.s32.totalorder %s251, 31
      %s253 = scalar_select %p252, %s251, 31
      %s254 = smul.addr %s253, 4
      %s255 = scalar_lea.vmem %s0, %s254
      %s256 = smul.u32 16, %s18
      %s257 = smul.u32 16, %s18
      %p258 = scmp.lt.s32.totalorder %s257, 31
      %s259 = scalar_select %p258, %s257, 31
      %s260 = smul.addr %s259, 8
      %s261 = scalar_lea.vmem %s5, %s260
      %s262 = smul.u32 16, %s18
      %s263 = smul.u32 16, %s18
      %p264 = scmp.lt.s32.totalorder %s263, 31
      %s265 = scalar_select %p264, %s263, 31
      %s266 = smul.addr %s265, 8
      %s267 = scalar_lea.vmem %s6, %s266
      %s268 = smul.u32 16, %s18
      %v270 = vld [vmem:[%s255] sm:$0xf]
      %v271 = vld [vmem:[%s255 + $0x4] sm:$0xf]
      %v272 = vld [vmem:[%s255 + $0x8] sm:$0xf]
      %v273 = vld [vmem:[%s255 + $0xc] sm:$0xf]
      %v274 = vld [vmem:[%s255 + $0x10] sm:$0xf]
      %v275 = vld [vmem:[%s255 + $0x14] sm:$0xf]
      %v276 = vld [vmem:[%s255 + $0x18] sm:$0xf]
      %v277 = vld [vmem:[%s255 + $0x1c] sm:$0xf]
      %v278 = vld [vmem:[%s255 + $0x20] sm:$0xf]
      %v279 = vld [vmem:[%s255 + $0x24] sm:$0xf]
      %v280 = vld [vmem:[%s255 + $0x28] sm:$0xf]
      %v281 = vld [vmem:[%s255 + $0x2c] sm:$0xf]
      %v282 = vld [vmem:[%s255 + $0x30] sm:$0xf]
      %v283 = vld [vmem:[%s255 + $0x34] sm:$0xf]
      %v284 = vld [vmem:[%s255 + $0x38] sm:$0xf]
      %v285 = vld [vmem:[%s255 + $0x3c] sm:$0xf]
      %v286 = vld [vmem:[%s1] sm:$0xf]
      %v287 = vld [vmem:[%s1 + $0x4] sm:$0xf]
      %v288 = vld [vmem:[%s1 + $0x8] sm:$0xf]
      %v289 = vld [vmem:[%s1 + $0xc] sm:$0xf]
      %v290 = vld [vmem:[%s2] sm:$0x1]
      %v292 = vperm.slane %v290, 0
      %v310 = vunpack.c.l.b16 %v270
      %v311 = vunpack.c.l.b16 %v271
      %v312 = vunpack.c.l.b16 %v272
      %v313 = vunpack.c.l.b16 %v273
      %v314 = vunpack.c.l.b16 %v274
      %v315 = vunpack.c.l.b16 %v275
      %v316 = vunpack.c.l.b16 %v276
      %v317 = vunpack.c.l.b16 %v277
      %v318 = vunpack.c.l.b16 %v278
      %v319 = vunpack.c.l.b16 %v279
      %v320 = vunpack.c.l.b16 %v280
      %v321 = vunpack.c.l.b16 %v281
      %v322 = vunpack.c.l.b16 %v282
      %v323 = vunpack.c.l.b16 %v283
      %v324 = vunpack.c.l.b16 %v284
      %v325 = vunpack.c.l.b16 %v285
      %v326 = vpack.c.b16 %v311, %v310
      %v327 = vpack.c.b16 %v313, %v312
      %v328 = vpack.c.b16 %v315, %v314
      %v329 = vpack.c.b16 %v317, %v316
      %v330 = vpack.c.b16 %v319, %v318
      %v331 = vpack.c.b16 %v321, %v320
      %v332 = vpack.c.b16 %v323, %v322
      %v333 = vpack.c.b16 %v325, %v324
      %v338 = vunpack.c.l.b16 %v286
      %v339 = vunpack.c.l.b16 %v287
      %v340 = vunpack.c.l.b16 %v288
      %v341 = vunpack.c.l.b16 %v289
      %v342 = vpack.c.b16 %v339, %v338
      %v343 = vpack.c.b16 %v341, %v340
      %vm346 = vcmask 261120
      %v348 = vsel %vm346, %v326, 0
      %v351 = vsel %vm346, %v327, 0
      %v354 = vsel %vm346, %v328, 0
      %v357 = vsel %vm346, %v329, 0
      %v360 = vsel %vm346, %v330, 0
      %v363 = vsel %vm346, %v331, 0
      %v366 = vsel %vm346, %v332, 0
      %v369 = vsel %vm346, %v333, 0
      %371 = vmatpush.bf16.msra.mxu0 0
      %372 = vmatpush.bf16.msra.mxu0 0
      %373 = vmatpush.bf16.msra.mxu0 0
      %374 = vmatpush.bf16.msra.mxu0 0
      %375 = vmatpush.bf16.msra.mxu0 0
      %376 = vmatpush.bf16.msra.mxu0 0
      %377 = vmatpush.bf16.msra.mxu0 %v343
      %378 = vmatpush.bf16.msra.mxu0 %v342
      %379 = vmatmul.bf16.gmra.mxu0 %v348
      %v380 = vpop.f32.mrf.mxu0
      %v381 = vadd.f32 %v292, %v380
      %v382 = vpop.f32.mrf.mxu0
      %v383 = vadd.f32 %v292, %v382
      %384 = vmatmul.bf16.gmra.mxu0 %v351
      %v385 = vpop.f32.mrf.mxu0
      %v386 = vadd.f32 %v292, %v385
      %v387 = vpop.f32.mrf.mxu0
      %v388 = vadd.f32 %v292, %v387
      %389 = vmatmul.bf16.gmra.mxu0 %v354
      %v390 = vpop.f32.mrf.mxu0
      %v391 = vadd.f32 %v292, %v390
      %v392 = vpop.f32.mrf.mxu0
      %v393 = vadd.f32 %v292, %v392
      %394 = vmatmul.bf16.gmra.mxu0 %v357
      %v395 = vpop.f32.mrf.mxu0
      %v396 = vadd.f32 %v292, %v395
      %v397 = vpop.f32.mrf.mxu0
      %v398 = vadd.f32 %v292, %v397
      %399 = vmatmul.bf16.gmra.mxu0 %v360
      %v400 = vpop.f32.mrf.mxu0
      %v401 = vadd.f32 %v292, %v400
      %v402 = vpop.f32.mrf.mxu0
      %v403 = vadd.f32 %v292, %v402
      %404 = vmatmul.bf16.gmra.mxu0 %v363
      %v405 = vpop.f32.mrf.mxu0
      %v406 = vadd.f32 %v292, %v405
      %v407 = vpop.f32.mrf.mxu0
      %v408 = vadd.f32 %v292, %v407
      %409 = vmatmul.bf16.gmra.mxu0 %v366
      %v410 = vpop.f32.mrf.mxu0
      %v411 = vadd.f32 %v292, %v410
      %v412 = vpop.f32.mrf.mxu0
      %v413 = vadd.f32 %v292, %v412
      %414 = vmatmul.bf16.gmra.mxu0 %v369
      %v415 = vpop.f32.mrf.mxu0
      %v416 = vadd.f32 %v292, %v415
      %v417 = vpop.f32.mrf.mxu0
      %v418 = vadd.f32 %v292, %v417
      %419 = vdwg.mxu0
      %v420 = vtanh.pop %v381
      %v421 = vtanh.pop %v383
      %v422 = vtanh.pop %v386
      %v423 = vtanh.pop %v388
      %v424 = vtanh.pop %v391
      %v425 = vtanh.pop %v393
      %v426 = vtanh.pop %v396
      %v427 = vtanh.pop %v398
      %v428 = vtanh.pop %v401
      %v429 = vtanh.pop %v403
      %v430 = vtanh.pop %v406
      %v431 = vtanh.pop %v408
      %v432 = vtanh.pop %v411
      %v433 = vtanh.pop %v413
      %v434 = vtanh.pop %v416
      %v435 = vtanh.pop %v418
      %v436 = vpack.c.bf16 %v421, %v420
      %v437 = vpack.c.bf16 %v423, %v422
      %v438 = vpack.c.bf16 %v425, %v424
      %v439 = vpack.c.bf16 %v427, %v426
      %v440 = vpack.c.bf16 %v429, %v428
      %v441 = vpack.c.bf16 %v431, %v430
      %v442 = vpack.c.bf16 %v433, %v432
      %v443 = vpack.c.bf16 %v435, %v434
      %v444 = vld [vmem:[%s3] sm:$0xf]
      %v445 = vld [vmem:[%s3 + $0x4] sm:$0xf]
      %v446 = vld [vmem:[%s3 + $0x8] sm:$0xf]
      %v447 = vld [vmem:[%s3 + $0xc] sm:$0xf]
      %v448 = vld [vmem:[%s4] sm:$0x1]
      %v450 = vperm.slane %v448, 0
      %v456 = vunpack.c.l.b16 %v444
      %v457 = vunpack.c.l.b16 %v445
      %v458 = vunpack.c.l.b16 %v446
      %v459 = vunpack.c.l.b16 %v447
      %v460 = vpack.c.b16 %v457, %v456
      %v461 = vpack.c.b16 %v459, %v458
      %v465 = vsel %vm346, %v436, 0
      %v468 = vsel %vm346, %v437, 0
      %v471 = vsel %vm346, %v438, 0
      %v474 = vsel %vm346, %v439, 0
      %v477 = vsel %vm346, %v440, 0
      %v480 = vsel %vm346, %v441, 0
      %v483 = vsel %vm346, %v442, 0
      %v486 = vsel %vm346, %v443, 0
      %488 = vmatpush.bf16.msra.mxu0 0
      %489 = vmatpush.bf16.msra.mxu0 0
      %490 = vmatpush.bf16.msra.mxu0 0
      %491 = vmatpush.bf16.msra.mxu0 0
      %492 = vmatpush.bf16.msra.mxu0 0
      %493 = vmatpush.bf16.msra.mxu0 0
      %494 = vmatpush.bf16.msra.mxu0 %v461
      %495 = vmatpush.bf16.msra.mxu0 %v460
      %496 = vmatmul.bf16.gmra.mxu0 %v465
      %v497 = vpop.f32.mrf.mxu0
      %v498 = vadd.f32 %v450, %v497
      %v499 = vpop.f32.mrf.mxu0
      %v500 = vadd.f32 %v450, %v499
      %501 = vmatmul.bf16.gmra.mxu0 %v468
      %v502 = vpop.f32.mrf.mxu0
      %v503 = vadd.f32 %v450, %v502
      %v504 = vpop.f32.mrf.mxu0
      %v505 = vadd.f32 %v450, %v504
      %506 = vmatmul.bf16.gmra.mxu0 %v471
      %v507 = vpop.f32.mrf.mxu0
      %v508 = vadd.f32 %v450, %v507
      %v509 = vpop.f32.mrf.mxu0
      %v510 = vadd.f32 %v450, %v509
      %511 = vmatmul.bf16.gmra.mxu0 %v474
      %v512 = vpop.f32.mrf.mxu0
      %v513 = vadd.f32 %v450, %v512
      %v514 = vpop.f32.mrf.mxu0
      %v515 = vadd.f32 %v450, %v514
      %516 = vmatmul.bf16.gmra.mxu0 %v477
      %v517 = vpop.f32.mrf.mxu0
      %v518 = vadd.f32 %v450, %v517
      %v519 = vpop.f32.mrf.mxu0
      %v520 = vadd.f32 %v450, %v519
      %521 = vmatmul.bf16.gmra.mxu0 %v480
      %v522 = vpop.f32.mrf.mxu0
      %v523 = vadd.f32 %v450, %v522
      %v524 = vpop.f32.mrf.mxu0
      %v525 = vadd.f32 %v450, %v524
      %526 = vmatmul.bf16.gmra.mxu0 %v483
      %v527 = vpop.f32.mrf.mxu0
      %v528 = vadd.f32 %v450, %v527
      %v529 = vpop.f32.mrf.mxu0
      %v530 = vadd.f32 %v450, %v529
      %531 = vmatmul.bf16.gmra.mxu0 %v486
      %v532 = vpop.f32.mrf.mxu0
      %v533 = vadd.f32 %v450, %v532
      %v534 = vpop.f32.mrf.mxu0
      %v535 = vadd.f32 %v450, %v534
      %536 = vdwg.mxu0
      %v537 = vtanh.pop %v498
      %v538 = vtanh.pop %v500
      %v539 = vtanh.pop %v503
      %v540 = vtanh.pop %v505
      %v541 = vtanh.pop %v508
      %v542 = vtanh.pop %v510
      %v543 = vtanh.pop %v513
      %v544 = vtanh.pop %v515
      %v545 = vtanh.pop %v518
      %v546 = vtanh.pop %v520
      %v547 = vtanh.pop %v523
      %v548 = vtanh.pop %v525
      %v549 = vtanh.pop %v528
      %v550 = vtanh.pop %v530
      %v551 = vtanh.pop %v533
      %v552 = vtanh.pop %v535
      %553 = vst.msk [vmem:[%s261] sm:$0xff] %vm346, %v537
      %554 = vst.msk [vmem:[%s261 + $0x8] sm:$0xff] %vm346, %v538
      %555 = vst.msk [vmem:[%s261 + $0x10] sm:$0xff] %vm346, %v539
      %556 = vst.msk [vmem:[%s261 + $0x18] sm:$0xff] %vm346, %v540
      %557 = vst.msk [vmem:[%s261 + $0x20] sm:$0xff] %vm346, %v541
      %558 = vst.msk [vmem:[%s261 + $0x28] sm:$0xff] %vm346, %v542
      %559 = vst.msk [vmem:[%s261 + $0x30] sm:$0xff] %vm346, %v543
      %560 = vst.msk [vmem:[%s261 + $0x38] sm:$0xff] %vm346, %v544
      %561 = vst.msk [vmem:[%s261 + $0x40] sm:$0xff] %vm346, %v545
      %562 = vst.msk [vmem:[%s261 + $0x48] sm:$0xff] %vm346, %v546
      %563 = vst.msk [vmem:[%s261 + $0x50] sm:$0xff] %vm346, %v547
      %564 = vst.msk [vmem:[%s261 + $0x58] sm:$0xff] %vm346, %v548
      %565 = vst.msk [vmem:[%s261 + $0x60] sm:$0xff] %vm346, %v549
      %566 = vst.msk [vmem:[%s261 + $0x68] sm:$0xff] %vm346, %v550
      %567 = vst.msk [vmem:[%s261 + $0x70] sm:$0xff] %vm346, %v551
      %568 = vst.msk [vmem:[%s261 + $0x78] sm:$0xff] %vm346, %v552
      %585 = vrot.lane.b32.xlu0 %v537, 96
      %v586 = vpop.permute.xlu0 %585
      %587 = vrot.lane.b32.xlu0 %v538, 96
      %v588 = vpop.permute.xlu0 %587
      %589 = vrot.lane.b32.xlu0 %v539, 96
      %v590 = vpop.permute.xlu0 %589
      %591 = vrot.lane.b32.xlu0 %v540, 96
      %v592 = vpop.permute.xlu0 %591
      %593 = vrot.lane.b32.xlu0 %v541, 96
      %v594 = vpop.permute.xlu0 %593
      %595 = vrot.lane.b32.xlu0 %v542, 96
      %v596 = vpop.permute.xlu0 %595
      %597 = vrot.lane.b32.xlu0 %v543, 96
      %v598 = vpop.permute.xlu0 %597
      %599 = vrot.lane.b32.xlu0 %v544, 96
      %v600 = vpop.permute.xlu0 %599
      %601 = vrot.lane.b32.xlu0 %v545, 96
      %v602 = vpop.permute.xlu0 %601
      %603 = vrot.lane.b32.xlu0 %v546, 96
      %v604 = vpop.permute.xlu0 %603
      %605 = vrot.lane.b32.xlu0 %v547, 96
      %v606 = vpop.permute.xlu0 %605
      %607 = vrot.lane.b32.xlu0 %v548, 96
      %v608 = vpop.permute.xlu0 %607
      %609 = vrot.lane.b32.xlu0 %v549, 96
      %v610 = vpop.permute.xlu0 %609
      %611 = vrot.lane.b32.xlu0 %v550, 96
      %v612 = vpop.permute.xlu0 %611
      %613 = vrot.lane.b32.xlu0 %v551, 96
      %v614 = vpop.permute.xlu0 %613
      %615 = vrot.lane.b32.xlu0 %v552, 96
      %v616 = vpop.permute.xlu0 %615
      %vm633 = vcmask 64512
      %634 = vst.msk [vmem:[%s267] sm:$0xff] %vm633, %v586
      %635 = vst.msk [vmem:[%s267 + $0x8] sm:$0xff] %vm633, %v588
      %636 = vst.msk [vmem:[%s267 + $0x10] sm:$0xff] %vm633, %v590
      %637 = vst.msk [vmem:[%s267 + $0x18] sm:$0xff] %vm633, %v592
      %638 = vst.msk [vmem:[%s267 + $0x20] sm:$0xff] %vm633, %v594
      %639 = vst.msk [vmem:[%s267 + $0x28] sm:$0xff] %vm633, %v596
      %640 = vst.msk [vmem:[%s267 + $0x30] sm:$0xff] %vm633, %v598
      %641 = vst.msk [vmem:[%s267 + $0x38] sm:$0xff] %vm633, %v600
      %642 = vst.msk [vmem:[%s267 + $0x40] sm:$0xff] %vm633, %v602
      %643 = vst.msk [vmem:[%s267 + $0x48] sm:$0xff] %vm633, %v604
      %644 = vst.msk [vmem:[%s267 + $0x50] sm:$0xff] %vm633, %v606
      %645 = vst.msk [vmem:[%s267 + $0x58] sm:$0xff] %vm633, %v608
      %646 = vst.msk [vmem:[%s267 + $0x60] sm:$0xff] %vm633, %v610
      %647 = vst.msk [vmem:[%s267 + $0x68] sm:$0xff] %vm633, %v612
      %648 = vst.msk [vmem:[%s267 + $0x70] sm:$0xff] %vm633, %v614
      %649 = vst.msk [vmem:[%s267 + $0x78] sm:$0xff] %vm633, %v616
      %s650 = smul.u32 16, %s18
      %p651 = scmp.lt.s32.totalorder %s650, 31
      %s652 = scalar_select %p651, %s650, 31
      %s653 = smul.addr %s652, 8
      %s654 = scalar_lea.vmem %s5, %s653
      %s655 = smul.u32 16, %s18
      %p656 = scmp.lt.s32.totalorder %s655, 31
      %s657 = scalar_select %p656, %s655, 31
      %s658 = smul.addr %s657, 8
      %s659 = scalar_lea.vmem %s6, %s658
      // Predicated region
      $region41: #{_lambda_.1} parent=39 // pred_check
        %p660 = pneg %p146
      $region42: #{_lambda_.1} parent=39 // pred_check_branch
        %662 = sbr.rel (%p660) target = $region44
      $region43: #{_lambda_.1} parent=39 // pred_region
        %s663 = smul.u32 16, %s18
      $region44: #{_lambda_.1} parent=39 // pred_fallthru
        _
      // Predicated region
      $region45: #{_lambda_.1} parent=39 // pred_check
        %p664 = pneg %p172
      $region46: #{_lambda_.1} parent=39 // pred_check_branch
        %666 = sbr.rel (%p664) target = $region48
      $region47: #{_lambda_.1} parent=39 // pred_region
        %s667 = smul.u32 16, %s18
      $region48: #{_lambda_.1} parent=39 // pred_fallthru
        _
    $region40: #{_lambda_.1} parent=5 // pred_fallthru
      _
    %p668 = scmp.le.s32.totalorder 2, %s13
    // Predicated region
    $region49: #{_lambda_.1} parent=5 // pred_check
      %p669 = pneg %p668
    $region50: #{_lambda_.1} parent=5 // pred_check_branch
      %671 = sbr.rel (%p669) target = $region52
    $region51: #{_lambda_.1} parent=5 // pred_region
      %s672 = ssub.s32 %s13, 2
      // Predicated region
      $region53: #{_lambda_.1} parent=51 // pred_check
        %p673 = pneg %p152
      $region54: #{_lambda_.1} parent=51 // pred_check_branch
        %675 = sbr.rel (%p673) target = $region56
      $region55: #{_lambda_.1} parent=51 // pred_region
        %s676 = smul.u32 16, %s19
        %p677 = scmp.lt.s32.totalorder %s676, 31
        %s678 = scalar_select %p677, %s676, 31
        %s679 = smul.addr %s678, 8
        %s680 = scalar_lea.vmem %s5, %s679
      $region56: #{_lambda_.1} parent=51 // pred_fallthru
        _
      // Predicated region
      $region57: #{_lambda_.1} parent=51 // pred_check
        %p681 = pneg %p178
      $region58: #{_lambda_.1} parent=51 // pred_check_branch
        %683 = sbr.rel (%p681) target = $region60
      $region59: #{_lambda_.1} parent=51 // pred_region
        %s684 = smul.u32 16, %s19
        %p685 = scmp.lt.s32.totalorder %s684, 31
        %s686 = scalar_select %p685, %s684, 31
        %s687 = smul.addr %s686, 8
        %s688 = scalar_lea.vmem %s6, %s687
      $region60: #{_lambda_.1} parent=51 // pred_fallthru
        _
    $region52: #{_lambda_.1} parent=5 // pred_fallthru
      _
  $region6: #{_lambda_.1} parent=0 // loop_footer
    %s17 = sadd.s32 1, %s13
  $region7: #{_lambda_.1} parent=0 // loop_footer_branch
    %12 = sbr.rel target = $region3
  $region8: #{_lambda_.1} parent=0 // loop_exit
    _

</llo_original>
